<compile_context>
chip_gen: v7x
topology: tpu7x:2x2x1
jax: 0.10.0
libtpu: 0.0.40
codegen_flags: <defaults>
</compile_context>

<pallas_src>
import functools

import jax
import jax.numpy as jnp
from jax import lax
from jax.experimental import pallas as pl
from jax.experimental.pallas import tpu as pltpu

EPS = 1e-5


def _residual_block_kernel(x_ref, w1_ref, w2_ref, w3_ref,
                           b1_ref, b2_ref, b3_ref,
                           o_ref, pad_ref, *,
                           Nb, H, W, Cin, Cmid, Cout, dilation, compute_dtype):
    d = dilation
    L1 = W * Cmid                                   # lanes of the mid slab

    # ---- input slab (Nb*H, W*Cin), lane-dense ----
    x_slab = x_ref[...]

    # ---- conv1 (1x1, BN folded) as block-diagonal slab matmul + bias + relu ----
    y1 = jnp.dot(x_slab.astype(compute_dtype), w1_ref[...],
                 preferred_element_type=jnp.float32)
    y1 = jnp.maximum(y1 + b1_ref[...], 0.0)          # (Nb*H, W*Cmid), f32

    # ---- stage y1 with a 2*d-row vertical zero halo (per image).  Horizontal
    #      padding is absorbed into the banded conv2 weights, so the scratch
    #      has no lane halo and the interior write is a full-row store. ----
    zero_rows = jnp.zeros((Nb, d, L1), pad_ref.dtype)
    pad_ref[:, pl.ds(0, d), :] = zero_rows
    pad_ref[:, pl.ds(H + d, d), :] = zero_rows
    pad_ref[:, pl.ds(d, H), :] = y1.reshape(Nb, H, L1).astype(pad_ref.dtype)

    # ---- conv2 (3x3, stride=1, padding=dilation, dilation) as 3 banded slab
    #      matmuls, one per kernel row kh, accumulated in f32. ----
    y2 = jnp.zeros((Nb * H, L1), jnp.float32)
    for kh in range(3):
        rows = pad_ref[:, pl.ds(kh * d, H), :].reshape(Nb * H, L1)
        y2 = y2 + jnp.dot(rows.astype(compute_dtype), w2_ref[kh],
                          preferred_element_type=jnp.float32)
    y2 = jnp.maximum(y2 + b2_ref[...], 0.0)           # (Nb*H, W*Cmid)

    # ---- conv3 (1x1, BN folded) + bias + residual add + relu ----
    y3 = jnp.dot(y2.astype(compute_dtype), w3_ref[...],
                 preferred_element_type=jnp.float32)
    y3 = jnp.maximum(y3 + b3_ref[...] + x_slab.astype(jnp.float32), 0.0)

    # ---- lane-dense store: output slab is already (Nb*H, W*Cout) ----
    o_ref[...] = y3.astype(o_ref.dtype)


def _fold_bn(w, bn):
    """Fold inference-mode BN (rows [gamma,beta,mean,var]) into conv weight+bias.

    `w` has the conv output channel as its LAST axis.
    """
    gamma, beta, mean, var = bn[0], bn[1], bn[2], bn[3]
    scale = gamma * lax.rsqrt(var + EPS)
    shift = beta - mean * scale
    return w * scale, shift


def residual_block(x, w1, w2, w3, bn1, bn2, bn3, *, dilation=1,
                   num_batch_blocks=2, compute_dtype=jnp.float32):
    """x: (N, H, W, Cin) NHWC; returns (N, H, W, Cout) with Cout == Cin.

    num_batch_blocks=2 (default) splits the batch over two grid steps so both
    TensorCores on v7x get work; on v5e/v6e the extra step is ~0.35 us.
    """
    N, H, W, Cin = x.shape
    Cmid = w1.shape[1]
    Cout = w3.shape[1]
    assert Cout == Cin, "residual add requires in_channels == 4*outputs"
    if N % num_batch_blocks != 0:
        num_batch_blocks = 1
    Nb = N // num_batch_blocks
    d = dilation

    # ---- host-side BN folding (exact affine in inference mode) ----
    w1f, b1 = _fold_bn(w1, bn1)                      # (Cin, Cmid), (Cmid,)
    w2f, b2 = _fold_bn(w2, bn2)                      # (3,3,Cmid,Cmid), (Cmid,)
    w3f, b3 = _fold_bn(w3, bn3)                      # (Cmid, Cout), (Cout,)

    # ---- host-side slab weights (pre-cast to compute_dtype) ----
    eye_w = jnp.eye(W, dtype=jnp.float32)
    w1_bd = jnp.kron(eye_w, w1f).astype(compute_dtype)        # (W*Cin,  W*Cmid)
    w3_bd = jnp.kron(eye_w, w3f).astype(compute_dtype)        # (W*Cmid, W*Cout)
    # Banded weight per kernel row kh: entry [w_src*Cmid+ci, w*Cmid+co] is
    # w2f[kh,kw,ci,co] when w_src == w + (kw-1)*d; out-of-range taps are simply
    # absent, which reproduces the zero padding.
    w2_band = jnp.stack([
        sum(jnp.kron(jnp.eye(W, W, k=(1 - kw) * d, dtype=jnp.float32),
                     w2f[kh, kw])
            for kw in range(3))
        for kh in range(3)], axis=0).astype(compute_dtype)    # (3, W*Cmid, W*Cmid)

    # Per-lane biases for the slab layout (channel bias tiled over W).
    b1s = jnp.tile(b1, W).reshape(1, W * Cmid).astype(jnp.float32)
    b2s = jnp.tile(b2, W).reshape(1, W * Cmid).astype(jnp.float32)
    b3s = jnp.tile(b3, W).reshape(1, W * Cout).astype(jnp.float32)

    # Free, contiguous host reshape to the lane-dense slab layout.
    x_slab = x.reshape(N * H, W * Cin)

    kernel = functools.partial(
        _residual_block_kernel,
        Nb=Nb, H=H, W=W, Cin=Cin, Cmid=Cmid, Cout=Cout,
        dilation=d, compute_dtype=compute_dtype)

    out_slab = pl.pallas_call(
        kernel,
        out_shape=jax.ShapeDtypeStruct((N * H, W * Cout), x.dtype),
        grid_spec=pltpu.PrefetchScalarGridSpec(
            num_scalar_prefetch=0,
            grid=(num_batch_blocks,),
            in_specs=[
                pl.BlockSpec((Nb * H, W * Cin), lambda g: (g, 0)),
                pl.BlockSpec(w1_bd.shape, lambda g: (0, 0)),
                pl.BlockSpec(w2_band.shape, lambda g: (0, 0, 0)),
                pl.BlockSpec(w3_bd.shape, lambda g: (0, 0)),
                pl.BlockSpec(b1s.shape, lambda g: (0, 0)),
                pl.BlockSpec(b2s.shape, lambda g: (0, 0)),
                pl.BlockSpec(b3s.shape, lambda g: (0, 0)),
            ],
            out_specs=pl.BlockSpec((Nb * H, W * Cout), lambda g: (g, 0)),
            scratch_shapes=[
                # y1 staging with 2*d-row vertical halo per image; no lane halo.
                pltpu.VMEM((Nb, H + 2 * d, W * Cmid), compute_dtype),
            ],
        ),
        compiler_params=pltpu.CompilerParams(
            dimension_semantics=("parallel",),
            vmem_limit_bytes=32 * 1024 * 1024),
    )(x_slab, w1_bd, w2_band, w3_bd, b1s, b2s, b3s)

    # Contiguous reshape back to NHWC (free on the host).
    return out_slab.reshape(N, H, W, Cout)


def _ref_forward(x, w1, w2, w3, bn1, bn2, bn3, *, dilation=1):
    """Pure-JAX reference (NHWC, un-folded BN) for validation."""
    dn = ("NHWC", "HWIO", "NHWC")

    def bn(y, p):
        g, b, m, v = p[0], p[1], p[2], p[3]
        return (y - m) / jnp.sqrt(v + EPS) * g + b

    Cin, Cmid = w1.shape
    Cout = w3.shape[1]
    y = lax.conv_general_dilated(x, w1.reshape(1, 1, Cin, Cmid),
                                 (1, 1), "VALID", dimension_numbers=dn)
    y = jax.nn.relu(bn(y, bn1))
    y = lax.conv_general_dilated(y, w2, (1, 1),
                                 [(dilation, dilation), (dilation, dilation)],
                                 rhs_dilation=(dilation, dilation),
                                 dimension_numbers=dn)
    y = jax.nn.relu(bn(y, bn2))
    y = lax.conv_general_dilated(y, w3.reshape(1, 1, Cmid, Cout),
                                 (1, 1), "VALID", dimension_numbers=dn)
    y = bn(y, bn3)
    return jax.nn.relu(y + x)


if __name__ == "__main__":
    # Small shapes: bottleneck with inputs=16, outputs=4 -> out channels = 16.
    N, H, W = 2, 16, 16
    Cin, Cmid = 16, 4
    Cout = Cmid * 4  # == Cin, so downsample=None residual add is valid

    key = jax.random.PRNGKey(0)
    ks = jax.random.split(key, 5)

    x = jax.random.normal(ks[0], (N, H, W, Cin), jnp.float32)

    w1 = jax.random.normal(ks[1], (Cin, Cmid), jnp.float32) * 0.2
    w2 = jax.random.normal(ks[2], (3, 3, Cmid, Cmid), jnp.float32) * 0.2
    w3 = jax.random.normal(ks[3], (Cmid, Cout), jnp.float32) * 0.2

    def make_bn(kg, kb, km, kv, c):
        gamma = jax.random.uniform(kg, (c,), jnp.float32, 0.5, 1.5)
        beta = jax.random.normal(kb, (c,), jnp.float32) * 0.1
        mean = jax.random.normal(km, (c,), jnp.float32) * 0.1
        var = jax.random.uniform(kv, (c,), jnp.float32, 0.5, 1.5)
        return jnp.stack([gamma, beta, mean, var], axis=0)  # (4, C)

    bn_keys = jax.random.split(ks[4], 12)
    bn1 = make_bn(*bn_keys[0:4], Cmid)
    bn2 = make_bn(*bn_keys[4:8], Cmid)
    bn3 = make_bn(*bn_keys[8:12], Cout)

    # f32 compute path: validated against the f32 reference.
    out = residual_block(x, w1, w2, w3, bn1, bn2, bn3, dilation=1)
    out = jax.block_until_ready(out)

    ref = _ref_forward(x, w1, w2, w3, bn1, bn2, bn3, dilation=1)
    assert out.shape == (N, H, W, Cout)
    assert jnp.allclose(out, ref, atol=1e-4, rtol=1e-4), (
        float(jnp.max(jnp.abs(out - ref))))

    # bf16 MXU path (weights pre-cast on host): just prove it runs cleanly.
    out_bf16 = residual_block(x, w1, w2, w3, bn1, bn2, bn3, dilation=1,
                              compute_dtype=jnp.bfloat16)
    out_bf16 = jax.block_until_ready(out_bf16)
    assert out_bf16.shape == (N, H, W, Cout)
    assert bool(jnp.all(jnp.isfinite(out_bf16)))

    print("KERNEL_OK")
</pallas_src>

<mosaic_0001>
module attributes {stable_mosaic.version = 11 : i64} {
  func.func @_residual_block_kernel(%arg0: i32, %arg1: memref<16x256xf32, #tpu.memory_space<vmem>>, %arg2: memref<256x64xf32, #tpu.memory_space<vmem>>, %arg3: memref<3x64x64xf32, #tpu.memory_space<vmem>>, %arg4: memref<64x256xf32, #tpu.memory_space<vmem>>, %arg5: memref<1x64xf32, #tpu.memory_space<vmem>>, %arg6: memref<1x64xf32, #tpu.memory_space<vmem>>, %arg7: memref<1x256xf32, #tpu.memory_space<vmem>>, %arg8: memref<16x256xf32, #tpu.memory_space<vmem>>, %arg9: memref<1x18x64xf32, #tpu.memory_space<vmem>>) attributes {dimension_semantics = [#tpu.dimension_semantics<parallel>], iteration_bounds = array<i64: 2>, scalar_prefetch = 0 : i64, scratch_operands = 1 : i64, tpu.core_type = #tpu.core_type<tc>, window_params = [{transform_indices = @transform_0, window_bounds = array<i64: 16, 256>}, {pipeline_mode = #tpu.pipeline_mode<synchronous>, transform_indices = @transform_1, window_bounds = array<i64: 256, 64>}, {pipeline_mode = #tpu.pipeline_mode<synchronous>, transform_indices = @transform_2, window_bounds = array<i64: 3, 64, 64>}, {pipeline_mode = #tpu.pipeline_mode<synchronous>, transform_indices = @transform_3, window_bounds = array<i64: 64, 256>}, {pipeline_mode = #tpu.pipeline_mode<synchronous>, transform_indices = @transform_4, window_bounds = array<i64: 1, 64>}, {pipeline_mode = #tpu.pipeline_mode<synchronous>, transform_indices = @transform_5, window_bounds = array<i64: 1, 64>}, {pipeline_mode = #tpu.pipeline_mode<synchronous>, transform_indices = @transform_6, window_bounds = array<i64: 1, 256>}, {transform_indices = @transform_7, window_bounds = array<i64: 16, 256>}]} {
    %c0 = arith.constant 0 : index
    %c0_0 = arith.constant 0 : index
    %0 = vector.load %arg1[%c0, %c0_0] : memref<16x256xf32, #tpu.memory_space<vmem>>, vector<16x256xf32>
    %c0_1 = arith.constant 0 : index
    %c0_2 = arith.constant 0 : index
    %1 = vector.load %arg2[%c0_1, %c0_2] : memref<256x64xf32, #tpu.memory_space<vmem>>, vector<256x64xf32>
    %cst = arith.constant dense<0.000000e+00> : vector<16x64xf32>
    %2 = tpu.matmul %0, %1, %cst {dimension_numbers = #tpu.dot_dimension_numbers<[1], [0], [0], [1], [0, 0, 1, 1], [], []>} : vector<16x256xf32>, vector<256x64xf32>, vector<16x64xf32> -> vector<16x64xf32>
    %c0_3 = arith.constant 0 : index
    %c0_4 = arith.constant 0 : index
    %3 = vector.load %arg5[%c0_3, %c0_4] : memref<1x64xf32, #tpu.memory_space<vmem>>, vector<1x64xf32>
    %4 = vector.broadcast %3 : vector<1x64xf32> to vector<16x64xf32>
    %5 = arith.addf %2, %4 : vector<16x64xf32>
    %cst_5 = arith.constant 0.000000e+00 : f32
    %6 = vector.broadcast %cst_5 : f32 to vector<16x64xf32>
    %7 = arith.maximumf %5, %6 : vector<16x64xf32>
    %cst_6 = arith.constant 0.000000e+00 : f32
    %8 = vector.broadcast %cst_6 : f32 to vector<1x1x64xf32>
    %c0_7 = arith.constant 0 : index
    %c0_8 = arith.constant 0 : index
    %c0_9 = arith.constant 0 : index
    %9 = vector.load %arg9[%c0_7, %c0_8, %c0_9] : memref<1x18x64xf32, #tpu.memory_space<vmem>>, vector<1x1x64xf32>
    tpu.vector_store %arg9[%c0_7, %c0_8, %c0_9], %8 {strides = array<i32>} : memref<1x18x64xf32, #tpu.memory_space<vmem>>, vector<1x1x64xf32>,
    %c0_10 = arith.constant 0 : index
    %c17 = arith.constant 17 : index
    %c0_11 = arith.constant 0 : index
    %10 = vector.load %arg9[%c0_10, %c17, %c0_11] : memref<1x18x64xf32, #tpu.memory_space<vmem>>, vector<1x1x64xf32>
    tpu.vector_store %arg9[%c0_10, %c17, %c0_11], %8 {strides = array<i32>} : memref<1x18x64xf32, #tpu.memory_space<vmem>>, vector<1x1x64xf32>,
    %11 = vector.shape_cast %7 : vector<16x64xf32> to vector<1x16x64xf32>
    %c0_12 = arith.constant 0 : index
    %c1 = arith.constant 1 : index
    %c0_13 = arith.constant 0 : index
    %12 = vector.load %arg9[%c0_12, %c1, %c0_13] : memref<1x18x64xf32, #tpu.memory_space<vmem>>, vector<1x16x64xf32>
    tpu.vector_store %arg9[%c0_12, %c1, %c0_13], %11 {strides = array<i32>} : memref<1x18x64xf32, #tpu.memory_space<vmem>>, vector<1x16x64xf32>,
    %cst_14 = arith.constant 0.000000e+00 : f32
    %13 = vector.broadcast %cst_14 : f32 to vector<16x64xf32>
    %c0_15 = arith.constant 0 : index
    %c0_16 = arith.constant 0 : index
    %c0_17 = arith.constant 0 : index
    %14 = vector.load %arg9[%c0_15, %c0_16, %c0_17] : memref<1x18x64xf32, #tpu.memory_space<vmem>>, vector<1x16x64xf32>
    %15 = vector.shape_cast %14 : vector<1x16x64xf32> to vector<16x64xf32>
    %c0_18 = arith.constant 0 : index
    %c0_19 = arith.constant 0 : index
    %c0_20 = arith.constant 0 : index
    %16 = vector.load %arg3[%c0_18, %c0_19, %c0_20] : memref<3x64x64xf32, #tpu.memory_space<vmem>>, vector<1x64x64xf32>
    %17 = vector.shape_cast %16 : vector<1x64x64xf32> to vector<64x64xf32>
    %cst_21 = arith.constant dense<0.000000e+00> : vector<16x64xf32>
    %18 = tpu.matmul %15, %17, %cst_21 {dimension_numbers = #tpu.dot_dimension_numbers<[1], [0], [0], [1], [0, 0, 1, 1], [], []>} : vector<16x64xf32>, vector<64x64xf32>, vector<16x64xf32> -> vector<16x64xf32>
    %19 = arith.addf %13, %18 : vector<16x64xf32>
    %c0_22 = arith.constant 0 : index
    %c1_23 = arith.constant 1 : index
    %c0_24 = arith.constant 0 : index
    %20 = vector.load %arg9[%c0_22, %c1_23, %c0_24] : memref<1x18x64xf32, #tpu.memory_space<vmem>>, vector<1x16x64xf32>
    %21 = vector.shape_cast %20 : vector<1x16x64xf32> to vector<16x64xf32>
    %c1_25 = arith.constant 1 : index
    %c0_26 = arith.constant 0 : index
    %c0_27 = arith.constant 0 : index
    %22 = vector.load %arg3[%c1_25, %c0_26, %c0_27] : memref<3x64x64xf32, #tpu.memory_space<vmem>>, vector<1x64x64xf32>
    %23 = vector.shape_cast %22 : vector<1x64x64xf32> to vector<64x64xf32>
    %cst_28 = arith.constant dense<0.000000e+00> : vector<16x64xf32>
    %24 = tpu.matmul %21, %23, %cst_28 {dimension_numbers = #tpu.dot_dimension_numbers<[1], [0], [0], [1], [0, 0, 1, 1], [], []>} : vector<16x64xf32>, vector<64x64xf32>, vector<16x64xf32> -> vector<16x64xf32>
    %25 = arith.addf %19, %24 : vector<16x64xf32>
    %c0_29 = arith.constant 0 : index
    %c2 = arith.constant 2 : index
    %c0_30 = arith.constant 0 : index
    %26 = vector.load %arg9[%c0_29, %c2, %c0_30] : memref<1x18x64xf32, #tpu.memory_space<vmem>>, vector<1x16x64xf32>
    %27 = vector.shape_cast %26 : vector<1x16x64xf32> to vector<16x64xf32>
    %c2_31 = arith.constant 2 : index
    %c0_32 = arith.constant 0 : index
    %c0_33 = arith.constant 0 : index
    %28 = vector.load %arg3[%c2_31, %c0_32, %c0_33] : memref<3x64x64xf32, #tpu.memory_space<vmem>>, vector<1x64x64xf32>
    %29 = vector.shape_cast %28 : vector<1x64x64xf32> to vector<64x64xf32>
    %cst_34 = arith.constant dense<0.000000e+00> : vector<16x64xf32>
    %30 = tpu.matmul %27, %29, %cst_34 {dimension_numbers = #tpu.dot_dimension_numbers<[1], [0], [0], [1], [0, 0, 1, 1], [], []>} : vector<16x64xf32>, vector<64x64xf32>, vector<16x64xf32> -> vector<16x64xf32>
    %31 = arith.addf %25, %30 : vector<16x64xf32>
    %c0_35 = arith.constant 0 : index
    %c0_36 = arith.constant 0 : index
    %32 = vector.load %arg6[%c0_35, %c0_36] : memref<1x64xf32, #tpu.memory_space<vmem>>, vector<1x64xf32>
    %33 = vector.broadcast %32 : vector<1x64xf32> to vector<16x64xf32>
    %34 = arith.addf %31, %33 : vector<16x64xf32>
    %cst_37 = arith.constant 0.000000e+00 : f32
    %35 = vector.broadcast %cst_37 : f32 to vector<16x64xf32>
    %36 = arith.maximumf %34, %35 : vector<16x64xf32>
    %c0_38 = arith.constant 0 : index
    %c0_39 = arith.constant 0 : index
    %37 = vector.load %arg4[%c0_38, %c0_39] : memref<64x256xf32, #tpu.memory_space<vmem>>, vector<64x256xf32>
    %cst_40 = arith.constant dense<0.000000e+00> : vector<16x256xf32>
    %38 = tpu.matmul %36, %37, %cst_40 {dimension_numbers = #tpu.dot_dimension_numbers<[1], [0], [0], [1], [0, 0, 1, 1], [], []>} : vector<16x64xf32>, vector<64x256xf32>, vector<16x256xf32> -> vector<16x256xf32>
    %c0_41 = arith.constant 0 : index
    %c0_42 = arith.constant 0 : index
    %39 = vector.load %arg7[%c0_41, %c0_42] : memref<1x256xf32, #tpu.memory_space<vmem>>, vector<1x256xf32>
    %40 = vector.broadcast %39 : vector<1x256xf32> to vector<16x256xf32>
    %41 = arith.addf %38, %40 : vector<16x256xf32>
    %42 = arith.addf %41, %0 : vector<16x256xf32>
    %cst_43 = arith.constant 0.000000e+00 : f32
    %43 = vector.broadcast %cst_43 : f32 to vector<16x256xf32>
    %44 = arith.maximumf %42, %43 : vector<16x256xf32>
    %c0_44 = arith.constant 0 : index
    %c0_45 = arith.constant 0 : index
    %45 = vector.load %arg8[%c0_44, %c0_45] : memref<16x256xf32, #tpu.memory_space<vmem>>, vector<16x256xf32>
    tpu.vector_store %arg8[%c0_44, %c0_45], %44 {strides = array<i32>} : memref<16x256xf32, #tpu.memory_space<vmem>>, vector<16x256xf32>,
    return
  }
  func.func @transform_0(%arg0: i32) -> (i32, i32) {
    %c0_i32 = arith.constant 0 : i32
    %c0_i32_0 = arith.constant 0 : i32
    return %arg0, %c0_i32 : i32, i32
  }
  func.func @transform_1(%arg0: i32) -> (i32, i32) {
    %c0_i32 = arith.constant 0 : i32
    %c0_i32_0 = arith.constant 0 : i32
    %c0_i32_1 = arith.constant 0 : i32
    return %c0_i32, %c0_i32_0 : i32, i32
  }
  func.func @transform_2(%arg0: i32) -> (i32, i32, i32) {
    %c0_i32 = arith.constant 0 : i32
    %c0_i32_0 = arith.constant 0 : i32
    %c0_i32_1 = arith.constant 0 : i32
    %c0_i32_2 = arith.constant 0 : i32
    return %c0_i32, %c0_i32_0, %c0_i32_1 : i32, i32, i32
  }
  func.func @transform_3(%arg0: i32) -> (i32, i32) {
    %c0_i32 = arith.constant 0 : i32
    %c0_i32_0 = arith.constant 0 : i32
    %c0_i32_1 = arith.constant 0 : i32
    return %c0_i32, %c0_i32_0 : i32, i32
  }
  func.func @transform_4(%arg0: i32) -> (i32, i32) {
    %c0_i32 = arith.constant 0 : i32
    %c0_i32_0 = arith.constant 0 : i32
    %c0_i32_1 = arith.constant 0 : i32
    return %c0_i32, %c0_i32_0 : i32, i32
  }
  func.func @transform_5(%arg0: i32) -> (i32, i32) {
    %c0_i32 = arith.constant 0 : i32
    %c0_i32_0 = arith.constant 0 : i32
    %c0_i32_1 = arith.constant 0 : i32
    return %c0_i32, %c0_i32_0 : i32, i32
  }
  func.func @transform_6(%arg0: i32) -> (i32, i32) {
    %c0_i32 = arith.constant 0 : i32
    %c0_i32_0 = arith.constant 0 : i32
    %c0_i32_1 = arith.constant 0 : i32
    return %c0_i32, %c0_i32_0 : i32, i32
  }
  func.func @transform_7(%arg0: i32) -> (i32, i32) {
    %c0_i32 = arith.constant 0 : i32
    %c0_i32_0 = arith.constant 0 : i32
    return %arg0, %c0_i32 : i32, i32
  }
}

</mosaic_0001>

<llo_original>
// kernel: tpu_custom_call.1
$region0: #{tpu_custom_call.1}
  #allocation0 [shape = 'u32[]', space=smem, size = 0x4, offset = 0x4, fixed_abs, tag = 'smem constant byte address 0x4 - core index']
  #allocation1 [shape = 'u32[144,128]{1,0:T(1,128)}', space=vmem, size = 0x12000, scoped, tag = 'internal scratch']
  #allocation2 [shape = 'f32[1,18,64]{2,1,0:T(8,128)}', space=vmem, size = 0x3000, scoped, tag = 'scratch operand']
  %s0 = inlined_call_operand.vmem [shape: f32[32,256], index: 0, kind: input, shape index: {}]
  %s1 = inlined_call_operand.vmem [shape: f32[256,64], index: 1, kind: input, shape index: {}]
  %s2 = inlined_call_operand.vmem [shape: f32[3,64,64], index: 2, kind: input, shape index: {}]
  %s3 = inlined_call_operand.vmem [shape: f32[64,256], index: 3, kind: input, shape index: {}]
  %s4 = inlined_call_operand.vmem [shape: f32[1,64], index: 4, kind: input, shape index: {}]
  %s5 = inlined_call_operand.vmem [shape: f32[1,64], index: 5, kind: input, shape index: {}]
  %s6 = inlined_call_operand.vmem [shape: f32[1,256], index: 6, kind: input, shape index: {}]
  %s7 = inlined_call_operand.hbm [shape: f32[32,256], index: 7, kind: output, shape index: {}]
  %s8 = sld [smem:[#allocation0]]
  $region61: #{tpu_custom_call.1} parent=0
    _
  %s10 = ssub.s32 1, %s8
  %s11 = scalar_select 0, %s10, %s8
  $region1: #{tpu_custom_call.1} parent=0
    #allocation3 [shape = 'u8[32768]{0}', space=vmem, size = 0x8000, scoped, tag = 'output window, operand 0']
    #allocation4 [shape = 's32[2]{0}', space=sflag, size = 0x8, scoped, tag = 'scoped memory for tpu_custom_call.1']
    %12 = vsyncpa [#allocation4], 0
    %s13 = scalar_lea.sflag [#allocation4], 1
    %14 = vsyncpa %s13, 0
    loop: start=0, step=1, limit=4
    $region2: #{tpu_custom_call.1} parent=1 // loop_pre_header
      _
    $region3: #{tpu_custom_call.1} parent=1 // loop_header
      %s16 = sphi 0, %s20
      %p17 = scmp.ge.s32.totalorder %s16, 4
      %s26 = sphi 0, %s28
      %s29 = sphi 0, %s26
      %s30 = sphi 0, %s29
      %s46 = sphi 0, %s30
      %s50 = sphi 0, %s50
      %s52 = sphi 0, %s50
      %s53 = sphi 0, %s52
      %s67 = sphi 0, %s53
      %s71 = sphi 0, %s71
      %s73 = sphi 0, %s71
      %s74 = sphi 0, %s73
      %s88 = sphi 0, %s74
      %s92 = sphi 0, %s92
      %s94 = sphi 0, %s92
      %s95 = sphi 0, %s94
      %s109 = sphi 0, %s95
      %s113 = sphi 0, %s113
      %s115 = sphi 0, %s113
      %s116 = sphi 0, %s115
      %s130 = sphi 0, %s116
      %s134 = sphi 0, %s134
      %s136 = sphi 0, %s134
      %s137 = sphi 0, %s136
      %s151 = sphi 0, %s137
      %s155 = sphi 0, %s155
      %s157 = sphi 0, %s155
      %s158 = sphi 0, %s157
      %s172 = sphi 0, %s158
      %s178 = sphi 0, %s180
      %s181 = sphi 0, %s178
      %s182 = sphi 0, %s181
      %s198 = sphi 0, %s182
    $region4: #{tpu_custom_call.1} parent=1 // loop_header_branch
      %19 = sbr.rel (%p17) target = $region8
    $region5: #{tpu_custom_call.1} parent=1 // loop_body
      %s21 = ssub.s32 %s16, 1
      %s22 = ssub.s32 %s16, 2
      %s23 = sadd.s32 %s16, 1
      %s24 = ssub.s32 %s16, %s23
      %p25 = scmp.eq.s32.totalorder %s24, 0
      %s27 = sadd.s32 %s26, 1
      %s28 = scalar_select %p25, %s26, %s27
      %p31 = pneg %p25
      %p32 = scmp.eq.s32.totalorder %s16, 1
      %p33 = por %p31, %p32
      %p34 = scmp.ne.s32.totalorder %s26, %s29
      %p35 = scmp.eq.s32.totalorder %s16, 0
      %p36 = por %p34, %p35
      %p37 = scmp.ne.s32.totalorder %s26, %s29
      %p38 = scmp.eq.s32.totalorder %s21, 1
      %p39 = por %p37, %p38
      %p40 = scmp.ne.s32.totalorder %s29, %s30
      %p41 = scmp.eq.s32.totalorder %s21, 0
      %p42 = por %p40, %p41
      %p43 = scmp.ne.s32.totalorder %s29, %s30
      %p44 = scmp.eq.s32.totalorder %s22, 1
      %p45 = por %p43, %p44
      %p47 = scmp.ne.s32.totalorder %s30, %s46
      %p48 = scmp.eq.s32.totalorder %s22, 0
      %p49 = por %p47, %p48
      %s51 = sadd.s32 %s50, 1
      %p54 = scmp.eq.s32.totalorder %s16, 1
      %p55 = scmp.ne.s32.totalorder %s50, %s52
      %p56 = scmp.eq.s32.totalorder %s16, 0
      %p57 = por %p55, %p56
      %p58 = scmp.ne.s32.totalorder %s50, %s52
      %p59 = scmp.eq.s32.totalorder %s21, 1
      %p60 = por %p58, %p59
      %p61 = scmp.ne.s32.totalorder %s52, %s53
      %p62 = scmp.eq.s32.totalorder %s21, 0
      %p63 = por %p61, %p62
      %p64 = scmp.ne.s32.totalorder %s52, %s53
      %p65 = scmp.eq.s32.totalorder %s22, 1
      %p66 = por %p64, %p65
      %p68 = scmp.ne.s32.totalorder %s53, %s67
      %p69 = scmp.eq.s32.totalorder %s22, 0
      %p70 = por %p68, %p69
      %s72 = sadd.s32 %s71, 1
      %p75 = scmp.eq.s32.totalorder %s16, 1
      %p76 = scmp.ne.s32.totalorder %s71, %s73
      %p77 = scmp.eq.s32.totalorder %s16, 0
      %p78 = por %p76, %p77
      %p79 = scmp.ne.s32.totalorder %s71, %s73
      %p80 = scmp.eq.s32.totalorder %s21, 1
      %p81 = por %p79, %p80
      %p82 = scmp.ne.s32.totalorder %s73, %s74
      %p83 = scmp.eq.s32.totalorder %s21, 0
      %p84 = por %p82, %p83
      %p85 = scmp.ne.s32.totalorder %s73, %s74
      %p86 = scmp.eq.s32.totalorder %s22, 1
      %p87 = por %p85, %p86
      %p89 = scmp.ne.s32.totalorder %s74, %s88
      %p90 = scmp.eq.s32.totalorder %s22, 0
      %p91 = por %p89, %p90
      %s93 = sadd.s32 %s92, 1
      %p96 = scmp.eq.s32.totalorder %s16, 1
      %p97 = scmp.ne.s32.totalorder %s92, %s94
      %p98 = scmp.eq.s32.totalorder %s16, 0
      %p99 = por %p97, %p98
      %p100 = scmp.ne.s32.totalorder %s92, %s94
      %p101 = scmp.eq.s32.totalorder %s21, 1
      %p102 = por %p100, %p101
      %p103 = scmp.ne.s32.totalorder %s94, %s95
      %p104 = scmp.eq.s32.totalorder %s21, 0
      %p105 = por %p103, %p104
      %p106 = scmp.ne.s32.totalorder %s94, %s95
      %p107 = scmp.eq.s32.totalorder %s22, 1
      %p108 = por %p106, %p107
      %p110 = scmp.ne.s32.totalorder %s95, %s109
      %p111 = scmp.eq.s32.totalorder %s22, 0
      %p112 = por %p110, %p111
      %s114 = sadd.s32 %s113, 1
      %p117 = scmp.eq.s32.totalorder %s16, 1
      %p118 = scmp.ne.s32.totalorder %s113, %s115
      %p119 = scmp.eq.s32.totalorder %s16, 0
      %p120 = por %p118, %p119
      %p121 = scmp.ne.s32.totalorder %s113, %s115
      %p122 = scmp.eq.s32.totalorder %s21, 1
      %p123 = por %p121, %p122
      %p124 = scmp.ne.s32.totalorder %s115, %s116
      %p125 = scmp.eq.s32.totalorder %s21, 0
      %p126 = por %p124, %p125
      %p127 = scmp.ne.s32.totalorder %s115, %s116
      %p128 = scmp.eq.s32.totalorder %s22, 1
      %p129 = por %p127, %p128
      %p131 = scmp.ne.s32.totalorder %s116, %s130
      %p132 = scmp.eq.s32.totalorder %s22, 0
      %p133 = por %p131, %p132
      %s135 = sadd.s32 %s134, 1
      %p138 = scmp.eq.s32.totalorder %s16, 1
      %p139 = scmp.ne.s32.totalorder %s134, %s136
      %p140 = scmp.eq.s32.totalorder %s16, 0
      %p141 = por %p139, %p140
      %p142 = scmp.ne.s32.totalorder %s134, %s136
      %p143 = scmp.eq.s32.totalorder %s21, 1
      %p144 = por %p142, %p143
      %p145 = scmp.ne.s32.totalorder %s136, %s137
      %p146 = scmp.eq.s32.totalorder %s21, 0
      %p147 = por %p145, %p146
      %p148 = scmp.ne.s32.totalorder %s136, %s137
      %p149 = scmp.eq.s32.totalorder %s22, 1
      %p150 = por %p148, %p149
      %p152 = scmp.ne.s32.totalorder %s137, %s151
      %p153 = scmp.eq.s32.totalorder %s22, 0
      %p154 = por %p152, %p153
      %s156 = sadd.s32 %s155, 1
      %p159 = scmp.eq.s32.totalorder %s16, 1
      %p160 = scmp.ne.s32.totalorder %s155, %s157
      %p161 = scmp.eq.s32.totalorder %s16, 0
      %p162 = por %p160, %p161
      %p163 = scmp.ne.s32.totalorder %s155, %s157
      %p164 = scmp.eq.s32.totalorder %s21, 1
      %p165 = por %p163, %p164
      %p166 = scmp.ne.s32.totalorder %s157, %s158
      %p167 = scmp.eq.s32.totalorder %s21, 0
      %p168 = por %p166, %p167
      %p169 = scmp.ne.s32.totalorder %s157, %s158
      %p170 = scmp.eq.s32.totalorder %s22, 1
      %p171 = por %p169, %p170
      %p173 = scmp.ne.s32.totalorder %s158, %s172
      %p174 = scmp.eq.s32.totalorder %s22, 0
      %p175 = por %p173, %p174
      %s176 = ssub.s32 %s16, %s23
      %p177 = scmp.eq.s32.totalorder %s176, 0
      %s179 = sadd.s32 %s178, 1
      %s180 = scalar_select %p177, %s178, %s179
      %p183 = pneg %p177
      %p184 = scmp.eq.s32.totalorder %s16, 1
      %p185 = por %p183, %p184
      %p186 = scmp.ne.s32.totalorder %s178, %s181
      %p187 = scmp.eq.s32.totalorder %s16, 0
      %p188 = por %p186, %p187
      %p189 = scmp.ne.s32.totalorder %s178, %s181
      %p190 = scmp.eq.s32.totalorder %s21, 1
      %p191 = por %p189, %p190
      %p192 = scmp.ne.s32.totalorder %s181, %s182
      %p193 = scmp.eq.s32.totalorder %s21, 0
      %p194 = por %p192, %p193
      %p195 = scmp.ne.s32.totalorder %s181, %s182
      %p196 = scmp.eq.s32.totalorder %s22, 1
      %p197 = por %p195, %p196
      %p199 = scmp.ne.s32.totalorder %s182, %s198
      %p200 = scmp.eq.s32.totalorder %s22, 0
      %p201 = por %p199, %p200
      %p202 = scmp.le.s32.totalorder 1, %s16
      %p203 = scmp.lt.s32.totalorder %s16, 3
      %p204 = pnand %p202, %p203
      %p205 = pneg %p204
      // Predicated region
      $region9: #{tpu_custom_call.1} parent=5 // pred_check
        _
      $region10: #{tpu_custom_call.1} parent=5 // pred_check_branch
        %207 = sbr.rel (%p204) target = $region12
      $region11: #{tpu_custom_call.1} parent=5 // pred_region
        %s208 = ssub.s32 %s16, 1
        // Predicated region
        $region13: #{tpu_custom_call.1} parent=11 // pred_check
          %p209 = pneg %p63
        $region14: #{tpu_custom_call.1} parent=11 // pred_check_branch
          %211 = sbr.rel (%p209) target = $region16
        $region15: #{tpu_custom_call.1} parent=11 // pred_region
          _
        $region16: #{tpu_custom_call.1} parent=11 // pred_fallthru
          _
        // Predicated region
        $region17: #{tpu_custom_call.1} parent=11 // pred_check
          %p212 = pneg %p84
        $region18: #{tpu_custom_call.1} parent=11 // pred_check_branch
          %214 = sbr.rel (%p212) target = $region20
        $region19: #{tpu_custom_call.1} parent=11 // pred_region
          _
        $region20: #{tpu_custom_call.1} parent=11 // pred_fallthru
          _
        // Predicated region
        $region21: #{tpu_custom_call.1} parent=11 // pred_check
          %p215 = pneg %p105
        $region22: #{tpu_custom_call.1} parent=11 // pred_check_branch
          %217 = sbr.rel (%p215) target = $region24
        $region23: #{tpu_custom_call.1} parent=11 // pred_region
          _
        $region24: #{tpu_custom_call.1} parent=11 // pred_fallthru
          _
        // Predicated region
        $region25: #{tpu_custom_call.1} parent=11 // pred_check
          %p218 = pneg %p126
        $region26: #{tpu_custom_call.1} parent=11 // pred_check_branch
          %220 = sbr.rel (%p218) target = $region28
        $region27: #{tpu_custom_call.1} parent=11 // pred_region
          _
        $region28: #{tpu_custom_call.1} parent=11 // pred_fallthru
          _
        // Predicated region
        $region29: #{tpu_custom_call.1} parent=11 // pred_check
          %p221 = pneg %p147
        $region30: #{tpu_custom_call.1} parent=11 // pred_check_branch
          %223 = sbr.rel (%p221) target = $region32
        $region31: #{tpu_custom_call.1} parent=11 // pred_region
          _
        $region32: #{tpu_custom_call.1} parent=11 // pred_fallthru
          _
        // Predicated region
        $region33: #{tpu_custom_call.1} parent=11 // pred_check
          %p224 = pneg %p168
        $region34: #{tpu_custom_call.1} parent=11 // pred_check_branch
          %226 = sbr.rel (%p224) target = $region36
        $region35: #{tpu_custom_call.1} parent=11 // pred_region
          _
        $region36: #{tpu_custom_call.1} parent=11 // pred_fallthru
          _
      $region12: #{tpu_custom_call.1} parent=5 // pred_fallthru
        _
      %p227 = scmp.lt.s32.totalorder %s16, 2
      // Predicated region
      $region37: #{tpu_custom_call.1} parent=5 // pred_check
        %p228 = pneg %p227
      $region38: #{tpu_custom_call.1} parent=5 // pred_check_branch
        %230 = sbr.rel (%p228) target = $region40
      $region39: #{tpu_custom_call.1} parent=5 // pred_region
        // Predicated region
        $region41: #{tpu_custom_call.1} parent=39 // pred_check
          %p231 = pneg %p36
        $region42: #{tpu_custom_call.1} parent=39 // pred_check_branch
          %233 = sbr.rel (%p231) target = $region44
        $region43: #{tpu_custom_call.1} parent=39 // pred_region
          %s234 = smul.u32 2, %s16
          %p235 = scmp.lt.s32.totalorder %s234, 3
          %s236 = scalar_select %p235, %s234, 3
          %s237 = smul.addr %s236, 2
          %s238 = smul.addr %s237, 8
          %s239 = scalar_lea.vmem %s0, %s238
          %s240 = smul.u32 2, %s16
        $region44: #{tpu_custom_call.1} parent=39 // pred_fallthru
          _
      $region40: #{tpu_custom_call.1} parent=5 // pred_fallthru
        _
      %p241 = scmp.le.s32.totalorder 1, %s16
      %p242 = scmp.lt.s32.totalorder %s16, 3
      %p243 = pnand %p241, %p242
      %p244 = pneg %p243
      // Predicated region
      $region45: #{tpu_custom_call.1} parent=5 // pred_check
        _
      $region46: #{tpu_custom_call.1} parent=5 // pred_check_branch
        %246 = sbr.rel (%p243) target = $region48
      $region47: #{tpu_custom_call.1} parent=5 // pred_region
        %s247 = ssub.s32 %s16, 1
        %s248 = smul.u32 2, %s21
        %p249 = scmp.lt.s32.totalorder %s248, 3
        %s250 = scalar_select %p249, %s248, 3
        %s251 = smul.addr %s250, 2
        %s252 = smul.addr %s251, 8
        %s253 = scalar_lea.vmem %s0, %s252
        %p254 = pneg %p42
        %p255 = pneg %p39
        %p256 = pneg %p63
        %p257 = pneg %p60
        %p258 = pneg %p84
        %p259 = pneg %p81
        %p260 = pneg %p105
        %p261 = pneg %p102
        %p262 = pneg %p126
        %p263 = pneg %p123
        %p264 = pneg %p147
        %p265 = pneg %p144
        %p266 = pneg %p168
        %p267 = pneg %p165
        %p268 = pneg %p194
        %p269 = pneg %p191
        %s270 = sand.u32 %s181, 1
        %s271 = scalar_lea.sflag [#allocation4], %s270
        %s272 = sand.u32 %s181, 1
        %s273 = smul.addr %s272, 32
        %s274 = scalar_lea.vmem [#allocation3], %s273
        %s275 = smul.u32 2, %s21
        %p276 = scmp.lt.s32.totalorder %s275, 3
        %s277 = scalar_select %p276, %s275, 3
        %s278 = smul.addr %s277, 2
        %s279 = smul.addr %s278, 8
        %s280 = scalar_lea.vmem %s0, %s279
        %s281 = smul.u32 2, %s21
        %s282 = smul.u32 2, %s21
        %v283 = vld [vmem:[%s280] sm:$0xff]
        %v284 = vld [vmem:[%s280 + $0x8] sm:$0xff]
        %v285 = vld [vmem:[%s280 + $0x10] sm:$0xff]
        %v286 = vld [vmem:[%s280 + $0x18] sm:$0xff]
        %v287 = vld [vmem:[%s1] sm:$0xff]
        %v288 = vld [vmem:[%s1 + $0x8] sm:$0xff]
        %v289 = vld [vmem:[%s1 + $0x10] sm:$0xff]
        %v290 = vld [vmem:[%s1 + $0x18] sm:$0xff]
        %v291 = vld [vmem:[%s1 + $0x20] sm:$0xff]
        %v292 = vld [vmem:[%s1 + $0x28] sm:$0xff]
        %v293 = vld [vmem:[%s1 + $0x30] sm:$0xff]
        %v294 = vld [vmem:[%s1 + $0x38] sm:$0xff]
        %v295 = vld [vmem:[%s1 + $0x40] sm:$0xff]
        %v296 = vld [vmem:[%s1 + $0x48] sm:$0xff]
        %v297 = vld [vmem:[%s1 + $0x50] sm:$0xff]
        %v298 = vld [vmem:[%s1 + $0x58] sm:$0xff]
        %v299 = vld [vmem:[%s1 + $0x60] sm:$0xff]
        %v300 = vld [vmem:[%s1 + $0x68] sm:$0xff]
        %v301 = vld [vmem:[%s1 + $0x70] sm:$0xff]
        %v302 = vld [vmem:[%s1 + $0x78] sm:$0xff]
        %v303 = vld [vmem:[%s1 + $0x80] sm:$0xff]
        %v304 = vld [vmem:[%s1 + $0x88] sm:$0xff]
        %v305 = vld [vmem:[%s1 + $0x90] sm:$0xff]
        %v306 = vld [vmem:[%s1 + $0x98] sm:$0xff]
        %v307 = vld [vmem:[%s1 + $0xa0] sm:$0xff]
        %v308 = vld [vmem:[%s1 + $0xa8] sm:$0xff]
        %v309 = vld [vmem:[%s1 + $0xb0] sm:$0xff]
        %v310 = vld [vmem:[%s1 + $0xb8] sm:$0xff]
        %v311 = vld [vmem:[%s1 + $0xc0] sm:$0xff]
        %v312 = vld [vmem:[%s1 + $0xc8] sm:$0xff]
        %v313 = vld [vmem:[%s1 + $0xd0] sm:$0xff]
        %v314 = vld [vmem:[%s1 + $0xd8] sm:$0xff]
        %v315 = vld [vmem:[%s1 + $0xe0] sm:$0xff]
        %v316 = vld [vmem:[%s1 + $0xe8] sm:$0xff]
        %v317 = vld [vmem:[%s1 + $0xf0] sm:$0xff]
        %v318 = vld [vmem:[%s1 + $0xf8] sm:$0xff]
        %v319 = vld [vmem:[%s4] sm:$0x1]
        %v321 = vlaneseq
        %v322 = vshrl.u32 %v321, 7
        %v323 = vsub.s32 0, %v322
        %v324 = vrot.slane %v319, %v323
        %326 = vmatprep.subr.mxu0 0.0
        %327 = vmatpush1.msra.mxu0 %v287
        %328 = vmatprep.subr.mxu0 0.0
        %329 = vmatpush1.msra.mxu0 %v288
        %330 = vmatprep.subr.mxu0 0.0
        %331 = vmatpush1.msra.mxu0 %v289
        %332 = vmatprep.subr.mxu0 0.0
        %333 = vmatpush1.msra.mxu0 %v290
        %334 = vmatprep.subr.mxu0 0.0
        %335 = vmatpush1.msra.mxu0 %v291
        %336 = vmatprep.subr.mxu0 0.0
        %337 = vmatpush1.msra.mxu0 %v292
        %338 = vmatprep.subr.mxu0 0.0
        %339 = vmatpush1.msra.mxu0 %v293
        %340 = vmatprep.subr.mxu0 0.0
        %341 = vmatpush1.msra.mxu0 %v294
        %342 = vmatprep.subr.mxu0 0.0
        %343 = vmatpush1.msra.mxu0 %v295
        %344 = vmatprep.subr.mxu0 0.0
        %345 = vmatpush1.msra.mxu0 %v296
        %346 = vmatprep.subr.mxu0 0.0
        %347 = vmatpush1.msra.mxu0 %v297
        %348 = vmatprep.subr.mxu0 0.0
        %349 = vmatpush1.msra.mxu0 %v298
        %350 = vmatprep.subr.mxu0 0.0
        %351 = vmatpush1.msra.mxu0 %v299
        %352 = vmatprep.subr.mxu0 0.0
        %353 = vmatpush1.msra.mxu0 %v300
        %354 = vmatprep.subr.mxu0 0.0
        %355 = vmatpush1.msra.mxu0 %v301
        %356 = vmatprep.subr.mxu0 0.0
        %357 = vmatpush1.msra.mxu0 %v302
        %358 = vmatprep.subr.mxu0 0.0
        %359 = vmatpush1.msra.mxu0 %v303
        %360 = vmatprep.subr.mxu0 0.0
        %361 = vmatpush1.msra.mxu0 %v304
        %362 = vmatprep.subr.mxu0 0.0
        %363 = vmatpush1.msra.mxu0 %v305
        %364 = vmatprep.subr.mxu0 0.0
        %365 = vmatpush1.msra.mxu0 %v306
        %366 = vmatprep.subr.mxu0 0.0
        %367 = vmatpush1.msra.mxu0 %v307
        %368 = vmatprep.subr.mxu0 0.0
        %369 = vmatpush1.msra.mxu0 %v308
        %370 = vmatprep.subr.mxu0 0.0
        %371 = vmatpush1.msra.mxu0 %v309
        %372 = vmatprep.subr.mxu0 0.0
        %373 = vmatpush1.msra.mxu0 %v310
        %374 = vmatprep.subr.mxu0 0.0
        %375 = vmatpush1.msra.mxu0 %v311
        %376 = vmatprep.subr.mxu0 0.0
        %377 = vmatpush1.msra.mxu0 %v312
        %378 = vmatprep.subr.mxu0 0.0
        %379 = vmatpush1.msra.mxu0 %v313
        %380 = vmatprep.subr.mxu0 0.0
        %381 = vmatpush1.msra.mxu0 %v314
        %382 = vmatprep.subr.mxu0 0.0
        %383 = vmatpush1.msra.mxu0 %v315
        %384 = vmatprep.subr.mxu0 0.0
        %385 = vmatpush1.msra.mxu0 %v316
        %386 = vmatprep.subr.mxu0 0.0
        %387 = vmatpush1.msra.mxu0 %v317
        %388 = vmatprep.subr.mxu0 0.0
        %389 = vmatpush1.msra.mxu0 %v318
        %390 = vmatprep.mubr.f32.mxu0 %v284
        %391 = vmatmul.mubr.f32.gmra.mrb[0].mxu0 %v283
        %v392 = vpop.f32.mrb[0].mxu0
        %v393 = vadd.f32 %v324, %v392
        %v394 = vpop.f32.mrb[0].mxu0
        %395 = vmatprep.mubr.f32.mxu0 %v286
        %396 = vmatmul.mubr.f32.gmra.mrb[0].mxu0 %v285
        %v397 = vpop.f32.mrb[0].mxu0
        %v398 = vadd.f32 %v324, %v397
        %v399 = vpop.f32.mrb[0].mxu0
        %400 = vdwg.mxu0
        %v401 = vmax.f32 %v393, 0.0
        %v402 = vmax.f32 %v398, 0.0
        %vm403 = vcmask 516096
        %404 = vst.msk [vmem:[#allocation2] sm:$0x1] %vm403, 0.0
        %405 = vst.msk [vmem:[#allocation2 + $0x11] sm:$0x1] %vm403, 0.0
        %vm406 = vcmask 523264
        %407 = vst.msk [vmem:[#allocation2 + $0x1] sm:$0xff] %vm406, %v401
        %408 = vst.msk [vmem:[#allocation2 + $0x9] sm:$0xff] %vm406, %v402
        %v409 = vld [vmem:[#allocation2] sm:$0xff]
        %v410 = vld [vmem:[#allocation2 + $0x8] sm:$0xff]
        %v411 = vld [vmem:[%s2] sm:$0xff]
        %v412 = vld [vmem:[%s2 + $0x8] sm:$0xff]
        %v413 = vld [vmem:[%s2 + $0x10] sm:$0xff]
        %v414 = vld [vmem:[%s2 + $0x18] sm:$0xff]
        %v415 = vld [vmem:[%s2 + $0x20] sm:$0xff]
        %v416 = vld [vmem:[%s2 + $0x28] sm:$0xff]
        %v417 = vld [vmem:[%s2 + $0x30] sm:$0xff]
        %v418 = vld [vmem:[%s2 + $0x38] sm:$0xff]
        %v419 = vld [vmem:[#allocation2 + $0x1] sm:$0xff]
        %v420 = vld [vmem:[#allocation2 + $0x9] sm:$0xff]
        %s421 = scalar_lea.vmem %s2, 64
        %v422 = vld [vmem:[%s421] sm:$0xff]
        %v423 = vld [vmem:[%s421 + $0x8] sm:$0xff]
        %v424 = vld [vmem:[%s421 + $0x10] sm:$0xff]
        %v425 = vld [vmem:[%s421 + $0x18] sm:$0xff]
        %v426 = vld [vmem:[%s421 + $0x20] sm:$0xff]
        %v427 = vld [vmem:[%s421 + $0x28] sm:$0xff]
        %v428 = vld [vmem:[%s421 + $0x30] sm:$0xff]
        %v429 = vld [vmem:[%s421 + $0x38] sm:$0xff]
        %v431 = vsel %vm406, %v419, 0
        %v434 = vsel %vm406, %v420, 0
        %436 = vmatprep.subr.mxu0 0.0
        %437 = vmatpush1.msra.mxu0 %v422
        %438 = vmatprep.subr.mxu0 0.0
        %439 = vmatpush1.msra.mxu0 %v423
        %440 = vmatprep.subr.mxu0 0.0
        %441 = vmatpush1.msra.mxu0 %v424
        %442 = vmatprep.subr.mxu0 0.0
        %443 = vmatpush1.msra.mxu0 %v425
        %444 = vmatprep.subr.mxu0 0.0
        %445 = vmatpush1.msra.mxu0 %v426
        %446 = vmatprep.subr.mxu0 0.0
        %447 = vmatpush1.msra.mxu0 %v427
        %448 = vmatprep.subr.mxu0 0.0
        %449 = vmatpush1.msra.mxu0 %v428
        %450 = vmatprep.subr.mxu0 0.0
        %451 = vmatpush1.msra.mxu0 %v429
        %452 = vmatprep.subr.mxu0 0.0
        %453 = vmatpush1.msra.mxu0 0.0
        %454 = vmatprep.subr.mxu0 0.0
        %455 = vmatpush1.msra.mxu0 0.0
        %456 = vmatprep.subr.mxu0 0.0
        %457 = vmatpush1.msra.mxu0 0.0
        %458 = vmatprep.subr.mxu0 0.0
        %459 = vmatpush1.msra.mxu0 0.0
        %460 = vmatprep.subr.mxu0 0.0
        %461 = vmatpush1.msra.mxu0 0.0
        %462 = vmatprep.subr.mxu0 0.0
        %463 = vmatpush1.msra.mxu0 0.0
        %464 = vmatprep.subr.mxu0 0.0
        %465 = vmatpush1.msra.mxu0 0.0
        %466 = vmatprep.subr.mxu0 0.0
        %467 = vmatpush1.msra.mxu0 0.0
        %468 = vmatprep.subr.mxu0 0.0
        %469 = vmatpush1.msra.mxu0 0.0
        %470 = vmatprep.subr.mxu0 0.0
        %471 = vmatpush1.msra.mxu0 0.0
        %472 = vmatprep.subr.mxu0 0.0
        %473 = vmatpush1.msra.mxu0 0.0
        %474 = vmatprep.subr.mxu0 0.0
        %475 = vmatpush1.msra.mxu0 0.0
        %476 = vmatprep.subr.mxu0 0.0
        %477 = vmatpush1.msra.mxu0 0.0
        %478 = vmatprep.subr.mxu0 0.0
        %479 = vmatpush1.msra.mxu0 0.0
        %480 = vmatprep.subr.mxu0 0.0
        %481 = vmatpush1.msra.mxu0 0.0
        %482 = vmatprep.subr.mxu0 0.0
        %483 = vmatpush1.msra.mxu0 0.0
        %484 = vmatprep.subr.mxu0 0.0
        %485 = vmatpush1.msra.mxu0 0.0
        %486 = vmatprep.subr.mxu0 0.0
        %487 = vmatpush1.msra.mxu0 0.0
        %488 = vmatprep.subr.mxu0 0.0
        %489 = vmatpush1.msra.mxu0 0.0
        %490 = vmatprep.subr.mxu0 0.0
        %491 = vmatpush1.msra.mxu0 0.0
        %492 = vmatprep.subr.mxu0 0.0
        %493 = vmatpush1.msra.mxu0 0.0
        %494 = vmatprep.subr.mxu0 0.0
        %495 = vmatpush1.msra.mxu0 0.0
        %496 = vmatprep.subr.mxu0 0.0
        %497 = vmatpush1.msra.mxu0 0.0
        %498 = vmatprep.subr.mxu0 0.0
        %499 = vmatpush1.msra.mxu0 0.0
        %500 = vmatprep.mubr.f32.mxu0 0.0
        %501 = vmatmul.mubr.f32.gmra.mrb[0].mxu0 %v431
        %v502 = vpop.f32.mrb[0].mxu0
        %v503 = vadd.f32 0.0, %v502
        %v504 = vpop.f32.mrb[0].mxu0
        %505 = vmatprep.mubr.f32.mxu0 0.0
        %506 = vmatmul.mubr.f32.gmra.mrb[0].mxu0 %v434
        %v507 = vpop.f32.mrb[0].mxu0
        %v508 = vadd.f32 0.0, %v507
        %v509 = vpop.f32.mrb[0].mxu0
        %510 = vdwg.mxu0
        %v512 = vsel %vm406, %v409, 0
        %v515 = vsel %vm406, %v410, 0
        %517 = vmatprep.subr.mxu0 0.0
        %518 = vmatpush1.msra.mxu0 %v411
        %519 = vmatprep.subr.mxu0 0.0
        %520 = vmatpush1.msra.mxu0 %v412
        %521 = vmatprep.subr.mxu0 0.0
        %522 = vmatpush1.msra.mxu0 %v413
        %523 = vmatprep.subr.mxu0 0.0
        %524 = vmatpush1.msra.mxu0 %v414
        %525 = vmatprep.subr.mxu0 0.0
        %526 = vmatpush1.msra.mxu0 %v415
        %527 = vmatprep.subr.mxu0 0.0
        %528 = vmatpush1.msra.mxu0 %v416
        %529 = vmatprep.subr.mxu0 0.0
        %530 = vmatpush1.msra.mxu0 %v417
        %531 = vmatprep.subr.mxu0 0.0
        %532 = vmatpush1.msra.mxu0 %v418
        %533 = vmatprep.subr.mxu0 0.0
        %534 = vmatpush1.msra.mxu0 0.0
        %535 = vmatprep.subr.mxu0 0.0
        %536 = vmatpush1.msra.mxu0 0.0
        %537 = vmatprep.subr.mxu0 0.0
        %538 = vmatpush1.msra.mxu0 0.0
        %539 = vmatprep.subr.mxu0 0.0
        %540 = vmatpush1.msra.mxu0 0.0
        %541 = vmatprep.subr.mxu0 0.0
        %542 = vmatpush1.msra.mxu0 0.0
        %543 = vmatprep.subr.mxu0 0.0
        %544 = vmatpush1.msra.mxu0 0.0
        %545 = vmatprep.subr.mxu0 0.0
        %546 = vmatpush1.msra.mxu0 0.0
        %547 = vmatprep.subr.mxu0 0.0
        %548 = vmatpush1.msra.mxu0 0.0
        %549 = vmatprep.subr.mxu0 0.0
        %550 = vmatpush1.msra.mxu0 0.0
        %551 = vmatprep.subr.mxu0 0.0
        %552 = vmatpush1.msra.mxu0 0.0
        %553 = vmatprep.subr.mxu0 0.0
        %554 = vmatpush1.msra.mxu0 0.0
        %555 = vmatprep.subr.mxu0 0.0
        %556 = vmatpush1.msra.mxu0 0.0
        %557 = vmatprep.subr.mxu0 0.0
        %558 = vmatpush1.msra.mxu0 0.0
        %559 = vmatprep.subr.mxu0 0.0
        %560 = vmatpush1.msra.mxu0 0.0
        %561 = vmatprep.subr.mxu0 0.0
        %562 = vmatpush1.msra.mxu0 0.0
        %563 = vmatprep.subr.mxu0 0.0
        %564 = vmatpush1.msra.mxu0 0.0
        %565 = vmatprep.subr.mxu0 0.0
        %566 = vmatpush1.msra.mxu0 0.0
        %567 = vmatprep.subr.mxu0 0.0
        %568 = vmatpush1.msra.mxu0 0.0
        %569 = vmatprep.subr.mxu0 0.0
        %570 = vmatpush1.msra.mxu0 0.0
        %571 = vmatprep.subr.mxu0 0.0
        %572 = vmatpush1.msra.mxu0 0.0
        %573 = vmatprep.subr.mxu0 0.0
        %574 = vmatpush1.msra.mxu0 0.0
        %575 = vmatprep.subr.mxu0 0.0
        %576 = vmatpush1.msra.mxu0 0.0
        %577 = vmatprep.subr.mxu0 0.0
        %578 = vmatpush1.msra.mxu0 0.0
        %579 = vmatprep.subr.mxu0 0.0
        %580 = vmatpush1.msra.mxu0 0.0
        %581 = vmatprep.mubr.f32.mxu0 0.0
        %582 = vmatmul.mubr.f32.gmra.mrb[0].mxu0 %v512
        %v583 = vpop.f32.mrb[0].mxu0
        %v584 = vadd.f32 %v503, %v583
        %v585 = vpop.f32.mrb[0].mxu0
        %586 = vmatprep.mubr.f32.mxu0 0.0
        %587 = vmatmul.mubr.f32.gmra.mrb[0].mxu0 %v515
        %v588 = vpop.f32.mrb[0].mxu0
        %v589 = vadd.f32 %v508, %v588
        %v590 = vpop.f32.mrb[0].mxu0
        %591 = vdwg.mxu0
        %v592 = vld [vmem:[#allocation2 + $0x2] sm:$0xff]
        %v593 = vld [vmem:[#allocation2 + $0xa] sm:$0xff]
        %s594 = scalar_lea.vmem %s2, 128
        %v595 = vld [vmem:[%s594] sm:$0xff]
        %v596 = vld [vmem:[%s594 + $0x8] sm:$0xff]
        %v597 = vld [vmem:[%s594 + $0x10] sm:$0xff]
        %v598 = vld [vmem:[%s594 + $0x18] sm:$0xff]
        %v599 = vld [vmem:[%s594 + $0x20] sm:$0xff]
        %v600 = vld [vmem:[%s594 + $0x28] sm:$0xff]
        %v601 = vld [vmem:[%s594 + $0x30] sm:$0xff]
        %v602 = vld [vmem:[%s594 + $0x38] sm:$0xff]
        %v604 = vsel %vm406, %v592, 0
        %v607 = vsel %vm406, %v593, 0
        %609 = vmatprep.subr.mxu0 0.0
        %610 = vmatpush1.msra.mxu0 %v595
        %611 = vmatprep.subr.mxu0 0.0
        %612 = vmatpush1.msra.mxu0 %v596
        %613 = vmatprep.subr.mxu0 0.0
        %614 = vmatpush1.msra.mxu0 %v597
        %615 = vmatprep.subr.mxu0 0.0
        %616 = vmatpush1.msra.mxu0 %v598
        %617 = vmatprep.subr.mxu0 0.0
        %618 = vmatpush1.msra.mxu0 %v599
        %619 = vmatprep.subr.mxu0 0.0
        %620 = vmatpush1.msra.mxu0 %v600
        %621 = vmatprep.subr.mxu0 0.0
        %622 = vmatpush1.msra.mxu0 %v601
        %623 = vmatprep.subr.mxu0 0.0
        %624 = vmatpush1.msra.mxu0 %v602
        %625 = vmatprep.subr.mxu0 0.0
        %626 = vmatpush1.msra.mxu0 0.0
        %627 = vmatprep.subr.mxu0 0.0
        %628 = vmatpush1.msra.mxu0 0.0
        %629 = vmatprep.subr.mxu0 0.0
        %630 = vmatpush1.msra.mxu0 0.0
        %631 = vmatprep.subr.mxu0 0.0
        %632 = vmatpush1.msra.mxu0 0.0
        %633 = vmatprep.subr.mxu0 0.0
        %634 = vmatpush1.msra.mxu0 0.0
        %635 = vmatprep.subr.mxu0 0.0
        %636 = vmatpush1.msra.mxu0 0.0
        %637 = vmatprep.subr.mxu0 0.0
        %638 = vmatpush1.msra.mxu0 0.0
        %639 = vmatprep.subr.mxu0 0.0
        %640 = vmatpush1.msra.mxu0 0.0
        %641 = vmatprep.subr.mxu0 0.0
        %642 = vmatpush1.msra.mxu0 0.0
        %643 = vmatprep.subr.mxu0 0.0
        %644 = vmatpush1.msra.mxu0 0.0
        %645 = vmatprep.subr.mxu0 0.0
        %646 = vmatpush1.msra.mxu0 0.0
        %647 = vmatprep.subr.mxu0 0.0
        %648 = vmatpush1.msra.mxu0 0.0
        %649 = vmatprep.subr.mxu0 0.0
        %650 = vmatpush1.msra.mxu0 0.0
        %651 = vmatprep.subr.mxu0 0.0
        %652 = vmatpush1.msra.mxu0 0.0
        %653 = vmatprep.subr.mxu0 0.0
        %654 = vmatpush1.msra.mxu0 0.0
        %655 = vmatprep.subr.mxu0 0.0
        %656 = vmatpush1.msra.mxu0 0.0
        %657 = vmatprep.subr.mxu0 0.0
        %658 = vmatpush1.msra.mxu0 0.0
        %659 = vmatprep.subr.mxu0 0.0
        %660 = vmatpush1.msra.mxu0 0.0
        %661 = vmatprep.subr.mxu0 0.0
        %662 = vmatpush1.msra.mxu0 0.0
        %663 = vmatprep.subr.mxu0 0.0
        %664 = vmatpush1.msra.mxu0 0.0
        %665 = vmatprep.subr.mxu0 0.0
        %666 = vmatpush1.msra.mxu0 0.0
        %667 = vmatprep.subr.mxu0 0.0
        %668 = vmatpush1.msra.mxu0 0.0
        %669 = vmatprep.subr.mxu0 0.0
        %670 = vmatpush1.msra.mxu0 0.0
        %671 = vmatprep.subr.mxu0 0.0
        %672 = vmatpush1.msra.mxu0 0.0
        %673 = vmatprep.mubr.f32.mxu0 0.0
        %674 = vmatmul.mubr.f32.gmra.mrb[0].mxu0 %v604
        %v675 = vpop.f32.mrb[0].mxu0
        %v676 = vadd.f32 0.0, %v675
        %v677 = vpop.f32.mrb[0].mxu0
        %678 = vmatprep.mubr.f32.mxu0 0.0
        %679 = vmatmul.mubr.f32.gmra.mrb[0].mxu0 %v607
        %v680 = vpop.f32.mrb[0].mxu0
        %v681 = vadd.f32 0.0, %v680
        %v682 = vpop.f32.mrb[0].mxu0
        %683 = vdwg.mxu0
        %v684 = vadd.f32 %v584, %v676
        %v685 = vadd.f32 %v589, %v681
        %v686 = vld [vmem:[%s5] sm:$0x1]
        %v688 = vlaneseq
        %v689 = vshrl.u32 %v688, 7
        %v690 = vsub.s32 0, %v689
        %v691 = vrot.slane %v686, %v690
        %v693 = vadd.f32 %v684, %v691
        %v694 = vadd.f32 %v685, %v691
        %v695 = vmax.f32 %v693, 0.0
        %v696 = vmax.f32 %v694, 0.0
        %v697 = vld [vmem:[%s3] sm:$0xff]
        %v698 = vld [vmem:[%s3 + $0x8] sm:$0xff]
        %v699 = vld [vmem:[%s3 + $0x10] sm:$0xff]
        %v700 = vld [vmem:[%s3 + $0x18] sm:$0xff]
        %v701 = vld [vmem:[%s3 + $0x20] sm:$0xff]
        %v702 = vld [vmem:[%s3 + $0x28] sm:$0xff]
        %v703 = vld [vmem:[%s3 + $0x30] sm:$0xff]
        %v704 = vld [vmem:[%s3 + $0x38] sm:$0xff]
        %v705 = vld [vmem:[%s3 + $0x40] sm:$0xff]
        %v706 = vld [vmem:[%s3 + $0x48] sm:$0xff]
        %v707 = vld [vmem:[%s3 + $0x50] sm:$0xff]
        %v708 = vld [vmem:[%s3 + $0x58] sm:$0xff]
        %v709 = vld [vmem:[%s3 + $0x60] sm:$0xff]
        %v710 = vld [vmem:[%s3 + $0x68] sm:$0xff]
        %v711 = vld [vmem:[%s3 + $0x70] sm:$0xff]
        %v712 = vld [vmem:[%s3 + $0x78] sm:$0xff]
        %v713 = vld [vmem:[%s6] sm:$0x3]
        %v715 = vlaneseq
        %v716 = vshrl.u32 %v715, 7
        %v717 = vsub.s32 0, %v716
        %v718 = vrot.slane %v713, %v717
        %v719 = vlaneseq
        %v720 = vshrl.u32 %v719, 7
        %v721 = vsub.s32 1, %v720
        %v722 = vrot.slane %v713, %v721
        %v726 = vsel %vm406, %v695, 0
        %v729 = vsel %vm406, %v696, 0
        %731 = vmatprep.subr.mxu0 %v698
        %732 = vmatpush1.msra.mxu0 %v697
        %733 = vmatprep.subr.mxu0 %v700
        %734 = vmatpush1.msra.mxu0 %v699
        %735 = vmatprep.subr.mxu0 %v702
        %736 = vmatpush1.msra.mxu0 %v701
        %737 = vmatprep.subr.mxu0 %v704
        %738 = vmatpush1.msra.mxu0 %v703
        %739 = vmatprep.subr.mxu0 %v706
        %740 = vmatpush1.msra.mxu0 %v705
        %741 = vmatprep.subr.mxu0 %v708
        %742 = vmatpush1.msra.mxu0 %v707
        %743 = vmatprep.subr.mxu0 %v710
        %744 = vmatpush1.msra.mxu0 %v709
        %745 = vmatprep.subr.mxu0 %v712
        %746 = vmatpush1.msra.mxu0 %v711
        %747 = vmatprep.subr.mxu0 0.0
        %748 = vmatpush1.msra.mxu0 0.0
        %749 = vmatprep.subr.mxu0 0.0
        %750 = vmatpush1.msra.mxu0 0.0
        %751 = vmatprep.subr.mxu0 0.0
        %752 = vmatpush1.msra.mxu0 0.0
        %753 = vmatprep.subr.mxu0 0.0
        %754 = vmatpush1.msra.mxu0 0.0
        %755 = vmatprep.subr.mxu0 0.0
        %756 = vmatpush1.msra.mxu0 0.0
        %757 = vmatprep.subr.mxu0 0.0
        %758 = vmatpush1.msra.mxu0 0.0
        %759 = vmatprep.subr.mxu0 0.0
        %760 = vmatpush1.msra.mxu0 0.0
        %761 = vmatprep.subr.mxu0 0.0
        %762 = vmatpush1.msra.mxu0 0.0
        %763 = vmatprep.subr.mxu0 0.0
        %764 = vmatpush1.msra.mxu0 0.0
        %765 = vmatprep.subr.mxu0 0.0
        %766 = vmatpush1.msra.mxu0 0.0
        %767 = vmatprep.subr.mxu0 0.0
        %768 = vmatpush1.msra.mxu0 0.0
        %769 = vmatprep.subr.mxu0 0.0
        %770 = vmatpush1.msra.mxu0 0.0
        %771 = vmatprep.subr.mxu0 0.0
        %772 = vmatpush1.msra.mxu0 0.0
        %773 = vmatprep.subr.mxu0 0.0
        %774 = vmatpush1.msra.mxu0 0.0
        %775 = vmatprep.subr.mxu0 0.0
        %776 = vmatpush1.msra.mxu0 0.0
        %777 = vmatprep.subr.mxu0 0.0
        %778 = vmatpush1.msra.mxu0 0.0
        %779 = vmatprep.subr.mxu0 0.0
        %780 = vmatpush1.msra.mxu0 0.0
        %781 = vmatprep.subr.mxu0 0.0
        %782 = vmatpush1.msra.mxu0 0.0
        %783 = vmatprep.subr.mxu0 0.0
        %784 = vmatpush1.msra.mxu0 0.0
        %785 = vmatprep.subr.mxu0 0.0
        %786 = vmatpush1.msra.mxu0 0.0
        %787 = vmatprep.subr.mxu0 0.0
        %788 = vmatpush1.msra.mxu0 0.0
        %789 = vmatprep.subr.mxu0 0.0
        %790 = vmatpush1.msra.mxu0 0.0
        %791 = vmatprep.subr.mxu0 0.0
        %792 = vmatpush1.msra.mxu0 0.0
        %793 = vmatprep.subr.mxu0 0.0
        %794 = vmatpush1.msra.mxu0 0.0
        %795 = vmatprep.mubr.f32.mxu0 0.0
        %796 = vmatmul.mubr.f32.gmra.mrb[0].mxu0 %v726
        %v797 = vpop.f32.mrb[0].mxu0
        %v798 = vadd.f32 %v718, %v797
        %v799 = vpop.f32.mrb[0].mxu0
        %v800 = vadd.f32 %v722, %v799
        %801 = vmatprep.mubr.f32.mxu0 0.0
        %802 = vmatmul.mubr.f32.gmra.mrb[0].mxu0 %v729
        %v803 = vpop.f32.mrb[0].mxu0
        %v804 = vadd.f32 %v718, %v803
        %v805 = vpop.f32.mrb[0].mxu0
        %v806 = vadd.f32 %v722, %v805
        %807 = vdwg.mxu0
        %v808 = vadd.f32 %v798, %v283
        %v809 = vadd.f32 %v800, %v284
        %v810 = vadd.f32 %v804, %v285
        %v811 = vadd.f32 %v806, %v286
        %v812 = vmax.f32 %v808, 0.0
        %v813 = vmax.f32 %v809, 0.0
        %v814 = vmax.f32 %v810, 0.0
        %v815 = vmax.f32 %v811, 0.0
        %816 = vst [vmem:[%s274] sm:$0xff] %v812
        %817 = vst [vmem:[%s274 + $0x8] sm:$0xff] %v813
        %818 = vst [vmem:[%s274 + $0x10] sm:$0xff] %v814
        %819 = vst [vmem:[%s274 + $0x18] sm:$0xff] %v815
        %s820 = sand.u32 %s181, 1
        %s821 = scalar_lea.sflag [#allocation4], %s820
        %s822 = sand.u32 %s181, 1
        %s823 = smul.addr %s822, 32
        %s824 = scalar_lea.vmem [#allocation3], %s823
        // Predicated region
        $region49: #{tpu_custom_call.1} parent=47 // pred_check
          %p825 = pneg %p191
        $region50: #{tpu_custom_call.1} parent=47 // pred_check_branch
          %827 = sbr.rel (%p825) target = $region52
        $region51: #{tpu_custom_call.1} parent=47 // pred_region
          %s828 = smul.u32 2, %s21
          %s830 = ssub.s32 512, 512
          %831 = vsyncadd %s821, %s830
          %s832 = smul.addr %s828, 2
          %s833 = smul.addr %s832, 128
          %s834 = scalar_lea.hbm %s7, %s833
          %s835 = sshll.u32 %s824, 4
          %s836 = int_to_ptr.vmem [resolvable:$true] %s835
          %841 = dma.vmem_to_hbm [thread:$0]  %s836, 512, %s834, %s821, 256, 256, 16
        $region52: #{tpu_custom_call.1} parent=47 // pred_fallthru
          _
      $region48: #{tpu_custom_call.1} parent=5 // pred_fallthru
        _
      %p842 = scmp.le.s32.totalorder 2, %s16
      // Predicated region
      $region53: #{tpu_custom_call.1} parent=5 // pred_check
        %p843 = pneg %p842
      $region54: #{tpu_custom_call.1} parent=5 // pred_check_branch
        %845 = sbr.rel (%p843) target = $region56
      $region55: #{tpu_custom_call.1} parent=5 // pred_region
        %s846 = ssub.s32 %s16, 2
        // Predicated region
        $region57: #{tpu_custom_call.1} parent=55 // pred_check
          %p847 = pneg %p197
        $region58: #{tpu_custom_call.1} parent=55 // pred_check_branch
          %849 = sbr.rel (%p847) target = $region60
        $region59: #{tpu_custom_call.1} parent=55 // pred_region
          %s850 = sand.u32 %s182, 1
          %s851 = scalar_lea.sflag [#allocation4], %s850
          %s852 = sand.u32 %s182, 1
          %s853 = smul.addr %s852, 32
          %s854 = scalar_lea.vmem [#allocation3], %s853
          %855 = dma.done %s851, 512
        $region60: #{tpu_custom_call.1} parent=55 // pred_fallthru
          _
      $region56: #{tpu_custom_call.1} parent=5 // pred_fallthru
        _
    $region6: #{tpu_custom_call.1} parent=1 // loop_footer
      %s20 = sadd.s32 1, %s16
    $region7: #{tpu_custom_call.1} parent=1 // loop_footer_branch
      %15 = sbr.rel target = $region3
    $region8: #{tpu_custom_call.1} parent=1 // loop_exit
      _
    %856 = vsyncpa [#allocation4], 1
    %s857 = scalar_lea.sflag [#allocation4], 1
    %858 = vsyncpa %s857, 1

</llo_original>
